<compile_context>
chip_gen: v5e
topology: v5e:2x2
jax: 0.10.0
libtpu: 0.0.40
codegen_flags: <defaults>
</compile_context>

<pallas_src>
import functools

import jax
import jax.numpy as jnp
from jax.experimental import pallas as pl
from jax.experimental.pallas import tpu as pltpu

# RescaledSiLULayer: SiLU rescaled to (approximately) preserve unit variance
# (GM-NN / ICTP convention).  y = c * x * sigmoid(x).
_SILU_RESCALE = 1.6765324703310907


def _forward_kernel(feats_ref, w_all_ref, b_all_ref, w1_ref, ss_ref, out_ref):
    """One tile of atoms (atoms on lanes).

    feats_ref : [n_inter*n_hidden, TA]   all interactions' features stacked on sublanes
    w_all_ref : [H1+1, n_inter*n_hidden] fused block-diagonal weights (NTK-pre-scaled):
                  row 0      = all intermediate LinearLayer(n_hidden, 1) readouts
                  rows 1..H1 = last readout's first Linear (transposed)
    b_all_ref : [H1+1, 1]  f32 bias column (row 0 = 0, rows 1.. = b0)
    w1_ref    : [H1+1, 1]  f32 final Linear weights (row 0 = 0, rows 1.. = w1/sqrt(H1))
    ss_ref    : [2, TA]    row 0: per-atom scale, row 1: per-atom shift
                           (shift already absorbs scale * sum-of-additive-biases)
    out_ref   : [1, TA]    atomic energies, lane-dense
    """
    # Single bf16 MXU pass over the feature block (block-diagonal fused matmul).
    hh = jnp.dot(w_all_ref[...], feats_ref[...],
                 preferred_element_type=jnp.float32)            # [H1+1, TA] f32
    pre = hh + b_all_ref[...]
    act = _SILU_RESCALE * pre * jax.nn.sigmoid(pre)             # RescaledSiLU (EUP)

    # Final Linear(H1, 1) as a VPU broadcast-mul + sublane reduce; w1 row 0 is zero so
    # the e_inter row does not contribute and no sublane-crossing slice of `act` occurs.
    e_last = jnp.sum(w1_ref[...] * act, axis=0, keepdims=True)  # [1, TA]
    total = hh[0:1, :] + e_last                                  # e_inter + e_last

    # ScaleShiftLayer: per-atom scale * energy + shift (linear biases pre-folded).
    out_ref[...] = ss_ref[0:1, :] * total + ss_ref[1:2, :]


@functools.partial(jax.jit, static_argnames=("tile_atoms",))
def forward_atomistic_network(atom_feats_t, w_lin, b_lin, w0, b0, w1, b1,
                              scale_at, shift_at, *, tile_atoms=None):
    """atom_feats_t : [n_inter, n_hidden, n_atoms]  atoms-on-lanes features (bf16 or f32)
       w_lin, b_lin : [n_inter-1, n_hidden, 1] / [n_inter-1, 1]  intermediate readouts
       w0,b0,w1,b1  : last readout MLP (NTK parameterization)
       scale_at/shift_at : [n_atoms] per-atom scale/shift (scale_params[species], ...)
       Returns atomic energies [n_atoms], float32."""
    n_inter, n_hidden, n_atoms = atom_feats_t.shape
    assert n_inter >= 2, "expects >=1 intermediate readout plus the final MLP readout"
    h1 = w0.shape[1]
    rows_int = (n_inter - 1) * n_hidden
    rows_all = n_inter * n_hidden
    cdt = atom_feats_t.dtype   # matmul input dtype (bf16 recommended for HBM transport)

    if tile_atoms is None:
        # Large lane tiles (up to 2048 -> 4 KiB contiguous DMA rows) amortize the
        # ~0.35 us per-grid-step overhead; cap so the grid keeps >= 4 steps so both
        # v7x TensorCores get balanced work.  Always a multiple of 128.
        quarter = (n_atoms // 4) // 128 * 128
        tile_atoms = int(min(2048, max(256, quarter)))
    assert tile_atoms % 128 == 0

    # ---- parameter prep (tiny, once per call under jit) --------------------------------
    inv_sqrt_nh = 1.0 / jnp.sqrt(jnp.float32(n_hidden))
    inv_sqrt_h1 = 1.0 / jnp.sqrt(jnp.float32(h1))

    # Fused block-diagonal weight: one MXU pass over the whole feature block, and no
    # sublane split of feats_ref (which could trigger a relayout copy per tile).
    wlin_row = (w_lin[..., 0] * inv_sqrt_nh).reshape(1, rows_int)   # intermediate readouts
    w0t = (w0 * inv_sqrt_nh).T                                      # [H1, n_hidden]
    w_all = jnp.zeros((h1 + 1, rows_all), jnp.float32)
    w_all = w_all.at[0:1, :rows_int].set(wlin_row)
    w_all = w_all.at[1:, rows_int:].set(w0t)
    w_all = w_all.astype(cdt)

    zero1 = jnp.zeros((1, 1), jnp.float32)
    b_all = jnp.concatenate([zero1, b0.reshape(h1, 1).astype(jnp.float32)], axis=0)
    w1col = jnp.concatenate(
        [zero1, (w1 * inv_sqrt_h1).reshape(h1, 1).astype(jnp.float32)], axis=0)

    # Purely additive biases (intermediate readouts + final Linear) fold into the shift:
    #   scale*(e + b_total) + shift == scale*e + (shift + scale*b_total)
    total_bias = jnp.sum(b_lin) + jnp.sum(b1)
    scale_f = scale_at.astype(jnp.float32)
    shift_f = shift_at.astype(jnp.float32) + scale_f * total_bias
    ss = jnp.stack([scale_f, shift_f], axis=0)                      # [2, n_atoms]

    # ---- atoms on lanes, NO host-side padding (ragged tail handled by Pallas) ----------
    feats_slab = atom_feats_t.reshape(rows_all, n_atoms)            # zero-copy reshape
    grid = (pl.cdiv(n_atoms, tile_atoms),)

    out = pl.pallas_call(
        _forward_kernel,
        out_shape=jax.ShapeDtypeStruct((1, n_atoms), jnp.float32),
        grid_spec=pltpu.PrefetchScalarGridSpec(
            num_scalar_prefetch=0,
            grid=grid,
            in_specs=[
                # Feature slab: the only large DMA.  (pipeline_mode=pl.Buffered(3) is an
                # optional cheap sweep once tiles are large; default double-buffering
                # already keeps this kernel DMA-bound.)
                pl.BlockSpec((rows_all, tile_atoms), lambda a: (0, a)),
                # Tiny resident operands (constant index maps -> fetched once).
                pl.BlockSpec((h1 + 1, rows_all), lambda a: (0, 0)),
                pl.BlockSpec((h1 + 1, 1), lambda a: (0, 0)),
                pl.BlockSpec((h1 + 1, 1), lambda a: (0, 0)),
                pl.BlockSpec((2, tile_atoms), lambda a: (0, a)),
            ],
            out_specs=pl.BlockSpec((1, tile_atoms), lambda a: (0, a)),
        ),
        compiler_params=pltpu.CompilerParams(
            dimension_semantics=("parallel",)),   # atom tiles shard across v7x TCs
    )(feats_slab, w_all, b_all, w1col, ss)

    return out[0]


if __name__ == "__main__":
    # Config (small, consistent with build_model):
    n_interactions = 2
    n_hidden_feats = 32
    readout_MLP = [16]        # last readout: Linear(32,16) -> RescaledSiLU -> Linear(16,1)
    n_species = 3
    n_atoms = 1000            # not a multiple of 128: exercises the pad-free ragged tail

    key = jax.random.PRNGKey(0)
    k_feats, k_wlin, k_blin, k_w0, k_b0, k_w1, k_b1, k_spec = jax.random.split(key, 8)

    # Synthetic representation output (stand-in for CartesianMACE features), produced
    # directly in the atoms-on-lanes layout and carried as bf16 across HBM.
    atom_feats_t = jax.random.normal(
        k_feats, (n_interactions, n_hidden_feats, n_atoms), dtype=jnp.float32
    ).astype(jnp.bfloat16)

    # Readout parameters (NTK parameterization; nonzero biases to exercise the bias fold).
    w_lin = jax.random.normal(k_wlin, (n_interactions - 1, n_hidden_feats, 1), jnp.float32)
    b_lin = 0.1 * jax.random.normal(k_blin, (n_interactions - 1, 1), jnp.float32)
    w0 = jax.random.normal(k_w0, (n_hidden_feats, readout_MLP[0]), jnp.float32)
    b0 = 0.1 * jax.random.normal(k_b0, (1, readout_MLP[0]), jnp.float32)
    w1 = jax.random.normal(k_w1, (readout_MLP[0], 1), jnp.float32)
    b1 = 0.1 * jax.random.normal(k_b1, (1, 1), jnp.float32)

    # ScaleShiftLayer params + per-atom gather (glue, plain JAX).
    shift_params = 0.5 * jnp.arange(n_species, dtype=jnp.float32)
    scale_params = 1.0 + 0.1 * jnp.arange(n_species, dtype=jnp.float32)
    species = jax.random.randint(k_spec, (n_atoms,), 0, n_species)
    scale_at = scale_params[species]   # [n_atoms]
    shift_at = shift_params[species]   # [n_atoms]

    atomic_energies = forward_atomistic_network(
        atom_feats_t, w_lin, b_lin, w0, b0, w1, b1, scale_at, shift_at)
    jax.block_until_ready(atomic_energies)

    # Pure-JAX reference (original module semantics).  Weights of the MXU matmuls are
    # bf16-rounded exactly as in the kernel, so the tolerance can be tight.
    feats_f32 = atom_feats_t.astype(jnp.float32)
    inv_nh = 1.0 / jnp.sqrt(jnp.float32(n_hidden_feats))
    inv_h1 = 1.0 / jnp.sqrt(jnp.float32(readout_MLP[0]))
    wlin_bf = (w_lin * inv_nh).astype(jnp.bfloat16).astype(jnp.float32)
    w0_bf = (w0 * inv_nh).astype(jnp.bfloat16).astype(jnp.float32)
    e_ref = jnp.zeros((n_atoms,), jnp.float32)
    for i in range(n_interactions - 1):
        e_ref = e_ref + (feats_f32[i].T @ wlin_bf[i] + b_lin[i])[:, 0]
    h_ref = feats_f32[-1].T @ w0_bf + b0
    h_ref = _SILU_RESCALE * h_ref * jax.nn.sigmoid(h_ref)
    e_ref = e_ref + (h_ref @ (w1 * inv_h1) + b1)[:, 0]
    ref = scale_at * e_ref + shift_at

    assert atomic_energies.shape == (n_atoms,)
    assert bool(jnp.all(jnp.isfinite(atomic_energies)))
    max_err = float(jnp.max(jnp.abs(atomic_energies - ref)))
    denom = float(jnp.max(jnp.abs(ref))) + 1.0
    # bf16-matched reference -> differences are accumulation-order / EUP-level only.
    assert max_err < 5e-3 * denom, (max_err, denom)
    print("KERNEL_OK")
</pallas_src>

<mosaic_0001>
module attributes {stable_mosaic.version = 11 : i64} {
  func.func @_forward_kernel(%arg0: i32, %arg1: memref<64x256xbf16, #tpu.memory_space<vmem>>, %arg2: memref<17x64xbf16, #tpu.memory_space<vmem>>, %arg3: memref<17x1xf32, #tpu.memory_space<vmem>>, %arg4: memref<17x1xf32, #tpu.memory_space<vmem>>, %arg5: memref<2x256xf32, #tpu.memory_space<vmem>>, %arg6: memref<1x256xf32, #tpu.memory_space<vmem>>) attributes {dimension_semantics = [#tpu.dimension_semantics<parallel>], iteration_bounds = array<i64: 4>, scalar_prefetch = 0 : i64, scratch_operands = 0 : i64, tpu.core_type = #tpu.core_type<tc>, window_params = [{transform_indices = @transform_0, window_bounds = array<i64: 64, 256>}, {pipeline_mode = #tpu.pipeline_mode<synchronous>, transform_indices = @transform_1, window_bounds = array<i64: 17, 64>}, {pipeline_mode = #tpu.pipeline_mode<synchronous>, transform_indices = @transform_2, window_bounds = array<i64: 17, 1>}, {pipeline_mode = #tpu.pipeline_mode<synchronous>, transform_indices = @transform_3, window_bounds = array<i64: 17, 1>}, {transform_indices = @transform_4, window_bounds = array<i64: 2, 256>}, {transform_indices = @transform_5, window_bounds = array<i64: 1, 256>}]} {
    %c0 = arith.constant 0 : index
    %c0_0 = arith.constant 0 : index
    %0 = vector.load %arg2[%c0, %c0_0] : memref<17x64xbf16, #tpu.memory_space<vmem>>, vector<17x64xbf16>
    %c0_1 = arith.constant 0 : index
    %c0_2 = arith.constant 0 : index
    %1 = vector.load %arg1[%c0_1, %c0_2] : memref<64x256xbf16, #tpu.memory_space<vmem>>, vector<64x256xbf16>
    %cst = arith.constant dense<0.000000e+00> : vector<17x256xf32>
    %2 = tpu.matmul %0, %1, %cst {dimension_numbers = #tpu.dot_dimension_numbers<[1], [0], [0], [1], [0, 0, 1, 1], [], []>} : vector<17x64xbf16>, vector<64x256xbf16>, vector<17x256xf32> -> vector<17x256xf32>
    %c0_3 = arith.constant 0 : index
    %c0_4 = arith.constant 0 : index
    %3 = vector.load %arg3[%c0_3, %c0_4] : memref<17x1xf32, #tpu.memory_space<vmem>>, vector<17x1xf32>
    %4 = vector.broadcast %3 : vector<17x1xf32> to vector<17x256xf32>
    %5 = arith.addf %2, %4 : vector<17x256xf32>
    %cst_5 = arith.constant 1.67653251 : f32
    %6 = vector.broadcast %cst_5 : f32 to vector<17x256xf32>
    %7 = arith.mulf %6, %5 : vector<17x256xf32>
    %8 = arith.negf %5 : vector<17x256xf32>
    %9 = math.exp %8 : vector<17x256xf32>
    %cst_6 = arith.constant 1.000000e+00 : f32
    %10 = vector.broadcast %cst_6 : f32 to vector<17x256xf32>
    %11 = arith.addf %10, %9 : vector<17x256xf32>
    %12 = arith.divf %10, %11 : vector<17x256xf32>
    %13 = arith.mulf %7, %12 : vector<17x256xf32>
    %c0_7 = arith.constant 0 : index
    %c0_8 = arith.constant 0 : index
    %14 = vector.load %arg4[%c0_7, %c0_8] : memref<17x1xf32, #tpu.memory_space<vmem>>, vector<17x1xf32>
    %15 = vector.broadcast %14 : vector<17x1xf32> to vector<17x256xf32>
    %16 = arith.mulf %15, %13 : vector<17x256xf32>
    %cst_9 = arith.constant dense<0.000000e+00> : vector<256xf32>
    %17 = vector.multi_reduction <add>, %16, %cst_9 [0] : vector<17x256xf32> to vector<256xf32>
    %18 = vector.shape_cast %17 : vector<256xf32> to vector<1x256xf32>
    %19 = vector.extract_strided_slice %2 {offsets = [0, 0], sizes = [1, 256], strides = [1, 1]} : vector<17x256xf32> to vector<1x256xf32>
    %20 = arith.addf %19, %18 : vector<1x256xf32>
    %c0_10 = arith.constant 0 : index
    %c0_11 = arith.constant 0 : index
    %21 = vector.load %arg5[%c0_10, %c0_11] : memref<2x256xf32, #tpu.memory_space<vmem>>, vector<1x256xf32>
    %22 = arith.mulf %21, %20 : vector<1x256xf32>
    %c1 = arith.constant 1 : index
    %c0_12 = arith.constant 0 : index
    %23 = vector.load %arg5[%c1, %c0_12] : memref<2x256xf32, #tpu.memory_space<vmem>>, vector<1x256xf32>
    %24 = arith.addf %22, %23 : vector<1x256xf32>
    %c0_13 = arith.constant 0 : index
    %c0_14 = arith.constant 0 : index
    %25 = vector.load %arg6[%c0_13, %c0_14] : memref<1x256xf32, #tpu.memory_space<vmem>>, vector<1x256xf32>
    tpu.vector_store %arg6[%c0_13, %c0_14], %24 {strides = array<i32>} : memref<1x256xf32, #tpu.memory_space<vmem>>, vector<1x256xf32>,
    return
  }
  func.func @transform_0(%arg0: i32) -> (i32, i32) {
    %c0_i32 = arith.constant 0 : i32
    %c0_i32_0 = arith.constant 0 : i32
    return %c0_i32, %arg0 : i32, i32
  }
  func.func @transform_1(%arg0: i32) -> (i32, i32) {
    %c0_i32 = arith.constant 0 : i32
    %c0_i32_0 = arith.constant 0 : i32
    %c0_i32_1 = arith.constant 0 : i32
    return %c0_i32, %c0_i32_0 : i32, i32
  }
  func.func @transform_2(%arg0: i32) -> (i32, i32) {
    %c0_i32 = arith.constant 0 : i32
    %c0_i32_0 = arith.constant 0 : i32
    %c0_i32_1 = arith.constant 0 : i32
    return %c0_i32, %c0_i32_0 : i32, i32
  }
  func.func @transform_3(%arg0: i32) -> (i32, i32) {
    %c0_i32 = arith.constant 0 : i32
    %c0_i32_0 = arith.constant 0 : i32
    %c0_i32_1 = arith.constant 0 : i32
    return %c0_i32, %c0_i32_0 : i32, i32
  }
  func.func @transform_4(%arg0: i32) -> (i32, i32) {
    %c0_i32 = arith.constant 0 : i32
    %c0_i32_0 = arith.constant 0 : i32
    return %c0_i32, %arg0 : i32, i32
  }
  func.func @transform_5(%arg0: i32) -> (i32, i32) {
    %c0_i32 = arith.constant 0 : i32
    %c0_i32_0 = arith.constant 0 : i32
    return %c0_i32, %arg0 : i32, i32
  }
}

</mosaic_0001>

<llo_original>
// kernel: forward_atomistic_network.1
$region0: #{forward_atomistic_network.1}
  #allocation0 [shape = 'u32[]', space=smem, size = 0x4, offset = 0x4, fixed_abs, tag = 'smem constant byte address 0x4 - core index']
  #allocation1 [shape = 'u32[72,128]{1,0:T(1,128)}', space=vmem, size = 0x9000, scoped, tag = 'internal scratch']
  %s0 = inlined_call_operand.hbm [shape: bf16[64,1000], index: 0, kind: input, shape index: {}]
  %s1 = inlined_call_operand.vmem [shape: bf16[17,64], index: 1, kind: input, shape index: {}]
  %s2 = inlined_call_operand.vmem [shape: f32[17,1], index: 2, kind: input, shape index: {}]
  %s3 = inlined_call_operand.vmem [shape: f32[17,1], index: 3, kind: input, shape index: {}]
  %s4 = inlined_call_operand.vmem [shape: f32[2,1000], index: 4, kind: input, shape index: {}]
  %s5 = inlined_call_operand.hbm [shape: f32[1,1000], index: 5, kind: output, shape index: {}]
  %s6 = sld [smem:[#allocation0]]
  $region57: #{forward_atomistic_network.1} parent=0
    _
  %s8 = ssub.s32 1, %s6
  %s9 = scalar_select 0, %s8, %s6
  $region1: #{forward_atomistic_network.1} parent=0
    #allocation2 [shape = 'u8[65536]{0}', space=vmem, size = 0x10000, scoped, tag = 'input window, operand 0']
    #allocation3 [shape = 's32[2]{0}', space=sflag, size = 0x8, scoped, tag = 'scoped memory for forward_atomistic_network.1']
    #allocation4 [shape = 's32[2]{0}', space=sflag, size = 0x8, scoped, tag = 'scoped memory for forward_atomistic_network.1']
    #allocation5 [shape = 'u8[2048]{0}', space=vmem, size = 0x800, scoped, tag = 'output window, operand 0']
    %10 = vsyncpa [#allocation3], 0
    %s11 = scalar_lea.sflag [#allocation3], 1
    %12 = vsyncpa %s11, 0
    %13 = vsyncpa [#allocation4], 0
    %s14 = scalar_lea.sflag [#allocation4], 1
    %15 = vsyncpa %s14, 0
    loop: start=0, step=1, limit=6
    $region2: #{forward_atomistic_network.1} parent=1 // loop_pre_header
      _
    $region3: #{forward_atomistic_network.1} parent=1 // loop_header
      %s17 = sphi 0, %s21
      %p18 = scmp.ge.s32.totalorder %s17, 6
      %s27 = sphi 0, %s29
      %s30 = sphi 0, %s27
      %s31 = sphi 0, %s30
      %s47 = sphi 0, %s31
      %s51 = sphi 0, %s51
      %s53 = sphi 0, %s51
      %s54 = sphi 0, %s53
      %s68 = sphi 0, %s54
      %s72 = sphi 0, %s72
      %s74 = sphi 0, %s72
      %s75 = sphi 0, %s74
      %s89 = sphi 0, %s75
      %s93 = sphi 0, %s93
      %s95 = sphi 0, %s93
      %s96 = sphi 0, %s95
      %s110 = sphi 0, %s96
      %s116 = sphi 0, %s118
      %s119 = sphi 0, %s116
      %s120 = sphi 0, %s119
      %s136 = sphi 0, %s120
      %s142 = sphi 0, %s144
      %s145 = sphi 0, %s142
      %s146 = sphi 0, %s145
      %s162 = sphi 0, %s146
    $region4: #{forward_atomistic_network.1} parent=1 // loop_header_branch
      %20 = sbr.rel (%p18) target = $region8
    $region5: #{forward_atomistic_network.1} parent=1 // loop_body
      %s22 = ssub.s32 %s17, 1
      %s23 = ssub.s32 %s17, 2
      %s24 = sadd.s32 %s17, 1
      %s25 = ssub.s32 %s17, %s24
      %p26 = scmp.eq.s32.totalorder %s25, 0
      %s28 = sadd.s32 %s27, 1
      %s29 = scalar_select %p26, %s27, %s28
      %p32 = pneg %p26
      %p33 = scmp.eq.s32.totalorder %s17, 3
      %p34 = por %p32, %p33
      %p35 = scmp.ne.s32.totalorder %s27, %s30
      %p36 = scmp.eq.s32.totalorder %s17, 0
      %p37 = por %p35, %p36
      %p38 = scmp.ne.s32.totalorder %s27, %s30
      %p39 = scmp.eq.s32.totalorder %s22, 3
      %p40 = por %p38, %p39
      %p41 = scmp.ne.s32.totalorder %s30, %s31
      %p42 = scmp.eq.s32.totalorder %s22, 0
      %p43 = por %p41, %p42
      %p44 = scmp.ne.s32.totalorder %s30, %s31
      %p45 = scmp.eq.s32.totalorder %s23, 3
      %p46 = por %p44, %p45
      %p48 = scmp.ne.s32.totalorder %s31, %s47
      %p49 = scmp.eq.s32.totalorder %s23, 0
      %p50 = por %p48, %p49
      %s52 = sadd.s32 %s51, 1
      %p55 = scmp.eq.s32.totalorder %s17, 3
      %p56 = scmp.ne.s32.totalorder %s51, %s53
      %p57 = scmp.eq.s32.totalorder %s17, 0
      %p58 = por %p56, %p57
      %p59 = scmp.ne.s32.totalorder %s51, %s53
      %p60 = scmp.eq.s32.totalorder %s22, 3
      %p61 = por %p59, %p60
      %p62 = scmp.ne.s32.totalorder %s53, %s54
      %p63 = scmp.eq.s32.totalorder %s22, 0
      %p64 = por %p62, %p63
      %p65 = scmp.ne.s32.totalorder %s53, %s54
      %p66 = scmp.eq.s32.totalorder %s23, 3
      %p67 = por %p65, %p66
      %p69 = scmp.ne.s32.totalorder %s54, %s68
      %p70 = scmp.eq.s32.totalorder %s23, 0
      %p71 = por %p69, %p70
      %s73 = sadd.s32 %s72, 1
      %p76 = scmp.eq.s32.totalorder %s17, 3
      %p77 = scmp.ne.s32.totalorder %s72, %s74
      %p78 = scmp.eq.s32.totalorder %s17, 0
      %p79 = por %p77, %p78
      %p80 = scmp.ne.s32.totalorder %s72, %s74
      %p81 = scmp.eq.s32.totalorder %s22, 3
      %p82 = por %p80, %p81
      %p83 = scmp.ne.s32.totalorder %s74, %s75
      %p84 = scmp.eq.s32.totalorder %s22, 0
      %p85 = por %p83, %p84
      %p86 = scmp.ne.s32.totalorder %s74, %s75
      %p87 = scmp.eq.s32.totalorder %s23, 3
      %p88 = por %p86, %p87
      %p90 = scmp.ne.s32.totalorder %s75, %s89
      %p91 = scmp.eq.s32.totalorder %s23, 0
      %p92 = por %p90, %p91
      %s94 = sadd.s32 %s93, 1
      %p97 = scmp.eq.s32.totalorder %s17, 3
      %p98 = scmp.ne.s32.totalorder %s93, %s95
      %p99 = scmp.eq.s32.totalorder %s17, 0
      %p100 = por %p98, %p99
      %p101 = scmp.ne.s32.totalorder %s93, %s95
      %p102 = scmp.eq.s32.totalorder %s22, 3
      %p103 = por %p101, %p102
      %p104 = scmp.ne.s32.totalorder %s95, %s96
      %p105 = scmp.eq.s32.totalorder %s22, 0
      %p106 = por %p104, %p105
      %p107 = scmp.ne.s32.totalorder %s95, %s96
      %p108 = scmp.eq.s32.totalorder %s23, 3
      %p109 = por %p107, %p108
      %p111 = scmp.ne.s32.totalorder %s96, %s110
      %p112 = scmp.eq.s32.totalorder %s23, 0
      %p113 = por %p111, %p112
      %s114 = ssub.s32 %s17, %s24
      %p115 = scmp.eq.s32.totalorder %s114, 0
      %s117 = sadd.s32 %s116, 1
      %s118 = scalar_select %p115, %s116, %s117
      %p121 = pneg %p115
      %p122 = scmp.eq.s32.totalorder %s17, 3
      %p123 = por %p121, %p122
      %p124 = scmp.ne.s32.totalorder %s116, %s119
      %p125 = scmp.eq.s32.totalorder %s17, 0
      %p126 = por %p124, %p125
      %p127 = scmp.ne.s32.totalorder %s116, %s119
      %p128 = scmp.eq.s32.totalorder %s22, 3
      %p129 = por %p127, %p128
      %p130 = scmp.ne.s32.totalorder %s119, %s120
      %p131 = scmp.eq.s32.totalorder %s22, 0
      %p132 = por %p130, %p131
      %p133 = scmp.ne.s32.totalorder %s119, %s120
      %p134 = scmp.eq.s32.totalorder %s23, 3
      %p135 = por %p133, %p134
      %p137 = scmp.ne.s32.totalorder %s120, %s136
      %p138 = scmp.eq.s32.totalorder %s23, 0
      %p139 = por %p137, %p138
      %s140 = ssub.s32 %s17, %s24
      %p141 = scmp.eq.s32.totalorder %s140, 0
      %s143 = sadd.s32 %s142, 1
      %s144 = scalar_select %p141, %s142, %s143
      %p147 = pneg %p141
      %p148 = scmp.eq.s32.totalorder %s17, 3
      %p149 = por %p147, %p148
      %p150 = scmp.ne.s32.totalorder %s142, %s145
      %p151 = scmp.eq.s32.totalorder %s17, 0
      %p152 = por %p150, %p151
      %p153 = scmp.ne.s32.totalorder %s142, %s145
      %p154 = scmp.eq.s32.totalorder %s22, 3
      %p155 = por %p153, %p154
      %p156 = scmp.ne.s32.totalorder %s145, %s146
      %p157 = scmp.eq.s32.totalorder %s22, 0
      %p158 = por %p156, %p157
      %p159 = scmp.ne.s32.totalorder %s145, %s146
      %p160 = scmp.eq.s32.totalorder %s23, 3
      %p161 = por %p159, %p160
      %p163 = scmp.ne.s32.totalorder %s146, %s162
      %p164 = scmp.eq.s32.totalorder %s23, 0
      %p165 = por %p163, %p164
      %p166 = scmp.le.s32.totalorder 1, %s17
      %p167 = scmp.lt.s32.totalorder %s17, 5
      %p168 = pnand %p166, %p167
      %p169 = pneg %p168
      // Predicated region
      $region9: #{forward_atomistic_network.1} parent=5 // pred_check
        _
      $region10: #{forward_atomistic_network.1} parent=5 // pred_check_branch
        %171 = sbr.rel (%p168) target = $region12
      $region11: #{forward_atomistic_network.1} parent=5 // pred_region
        %s172 = ssub.s32 %s17, 1
        // Predicated region
        $region13: #{forward_atomistic_network.1} parent=11 // pred_check
          %p173 = pneg %p64
        $region14: #{forward_atomistic_network.1} parent=11 // pred_check_branch
          %175 = sbr.rel (%p173) target = $region16
        $region15: #{forward_atomistic_network.1} parent=11 // pred_region
          _
        $region16: #{forward_atomistic_network.1} parent=11 // pred_fallthru
          _
        // Predicated region
        $region17: #{forward_atomistic_network.1} parent=11 // pred_check
          %p176 = pneg %p85
        $region18: #{forward_atomistic_network.1} parent=11 // pred_check_branch
          %178 = sbr.rel (%p176) target = $region20
        $region19: #{forward_atomistic_network.1} parent=11 // pred_region
          _
        $region20: #{forward_atomistic_network.1} parent=11 // pred_fallthru
          _
        // Predicated region
        $region21: #{forward_atomistic_network.1} parent=11 // pred_check
          %p179 = pneg %p106
        $region22: #{forward_atomistic_network.1} parent=11 // pred_check_branch
          %181 = sbr.rel (%p179) target = $region24
        $region23: #{forward_atomistic_network.1} parent=11 // pred_region
          _
        $region24: #{forward_atomistic_network.1} parent=11 // pred_fallthru
          _
      $region12: #{forward_atomistic_network.1} parent=5 // pred_fallthru
        _
      %p182 = scmp.lt.s32.totalorder %s17, 4
      // Predicated region
      $region25: #{forward_atomistic_network.1} parent=5 // pred_check
        %p183 = pneg %p182
      $region26: #{forward_atomistic_network.1} parent=5 // pred_check_branch
        %185 = sbr.rel (%p183) target = $region28
      $region27: #{forward_atomistic_network.1} parent=5 // pred_region
        // Predicated region
        $region29: #{forward_atomistic_network.1} parent=27 // pred_check
          %p186 = pneg %p37
        $region30: #{forward_atomistic_network.1} parent=27 // pred_check_branch
          %188 = sbr.rel (%p186) target = $region32
        $region31: #{forward_atomistic_network.1} parent=27 // pred_region
          %s189 = sand.u32 %s27, 1
          %s190 = scalar_lea.sflag [#allocation3], %s189
          %s191 = sand.u32 %s27, 1
          %s192 = smul.addr %s191, 64
          %s193 = scalar_lea.vmem [#allocation2], %s192
          %s194 = smul.u32 2, %s17
          %196 = vsyncadd %s190, 0
          %s197 = smul.addr %s194, 4
          %s198 = scalar_lea.hbm %s0, %s197
          %s199 = sshll.u32 %s198, 4
          %s200 = int_to_ptr.hbm [resolvable:$true] %s199
          %s201 = sshll.u32 %s193, 4
          %s202 = int_to_ptr.vmem [resolvable:$true] %s201
          %207 = dma.hbm_to_vmem [thread:$0]  %s200, 1024, %s202, %s190, 512, 128, 8
        $region32: #{forward_atomistic_network.1} parent=27 // pred_fallthru
          _
        // Predicated region
        $region33: #{forward_atomistic_network.1} parent=27 // pred_check
          %p208 = pneg %p126
        $region34: #{forward_atomistic_network.1} parent=27 // pred_check_branch
          %210 = sbr.rel (%p208) target = $region36
        $region35: #{forward_atomistic_network.1} parent=27 // pred_region
          %s211 = smul.u32 2, %s17
          %p212 = scmp.lt.s32.totalorder %s211, 7
          %s213 = scalar_select %p212, %s211, 7
          %s214 = smul.addr %s213, 2
          %s215 = scalar_lea.vmem %s4, %s214
          %s216 = smul.u32 2, %s17
        $region36: #{forward_atomistic_network.1} parent=27 // pred_fallthru
          _
      $region28: #{forward_atomistic_network.1} parent=5 // pred_fallthru
        _
      %p217 = scmp.le.s32.totalorder 1, %s17
      %p218 = scmp.lt.s32.totalorder %s17, 5
      %p219 = pnand %p217, %p218
      %p220 = pneg %p219
      // Predicated region
      $region37: #{forward_atomistic_network.1} parent=5 // pred_check
        _
      $region38: #{forward_atomistic_network.1} parent=5 // pred_check_branch
        %222 = sbr.rel (%p219) target = $region40
      $region39: #{forward_atomistic_network.1} parent=5 // pred_region
        %s223 = ssub.s32 %s17, 1
        %s224 = sand.u32 %s30, 1
        %s225 = scalar_lea.sflag [#allocation3], %s224
        %s226 = sand.u32 %s30, 1
        %s227 = smul.addr %s226, 64
        %s228 = scalar_lea.vmem [#allocation2], %s227
        // Predicated region
        $region41: #{forward_atomistic_network.1} parent=39 // pred_check
          %p229 = pneg %p43
        $region42: #{forward_atomistic_network.1} parent=39 // pred_check_branch
          %231 = sbr.rel (%p229) target = $region44
        $region43: #{forward_atomistic_network.1} parent=39 // pred_region
          %233 = dma.done %s225, 1024
        $region44: #{forward_atomistic_network.1} parent=39 // pred_fallthru
          _
        %s234 = sand.u32 %s30, 1
        %s235 = scalar_lea.sflag [#allocation3], %s234
        %s236 = sand.u32 %s30, 1
        %s237 = smul.addr %s236, 64
        %s238 = scalar_lea.vmem [#allocation2], %s237
        %p239 = pneg %p43
        %p240 = pneg %p40
        %p241 = pneg %p64
        %p242 = pneg %p61
        %p243 = pneg %p85
        %p244 = pneg %p82
        %p245 = pneg %p106
        %p246 = pneg %p103
        %s247 = smul.u32 2, %s22
        %p248 = scmp.lt.s32.totalorder %s247, 7
        %s249 = scalar_select %p248, %s247, 7
        %s250 = smul.addr %s249, 2
        %s251 = scalar_lea.vmem %s4, %s250
        %p252 = pneg %p132
        %p253 = pneg %p129
        %p254 = pneg %p158
        %p255 = pneg %p155
        %s256 = sand.u32 %s145, 1
        %s257 = scalar_lea.sflag [#allocation4], %s256
        %s258 = sand.u32 %s145, 1
        %s259 = smul.addr %s258, 2
        %s260 = scalar_lea.vmem [#allocation5], %s259
        %s261 = smul.u32 2, %s22
        %s262 = smul.u32 2, %s22
        %p263 = scmp.lt.s32.totalorder %s262, 7
        %s264 = scalar_select %p263, %s262, 7
        %s265 = smul.addr %s264, 2
        %s266 = scalar_lea.vmem %s4, %s265
        %s267 = smul.u32 2, %s22
        %s268 = smul.u32 2, %s22
        %v270 = vld [vmem:[%s1] sm:$0xf]
        %v271 = vld [vmem:[%s1 + $0x4] sm:$0xf]
        %v272 = vld [vmem:[%s1 + $0x8] sm:$0x1]
        %v273 = vld [vmem:[%s228] sm:$0xff]
        %v274 = vld [vmem:[%s228 + $0x8] sm:$0xff]
        %v275 = vld [vmem:[%s228 + $0x10] sm:$0xff]
        %v276 = vld [vmem:[%s228 + $0x18] sm:$0xff]
        %v277 = vld [vmem:[%s228 + $0x20] sm:$0xff]
        %v278 = vld [vmem:[%s228 + $0x28] sm:$0xff]
        %v279 = vld [vmem:[%s228 + $0x30] sm:$0xff]
        %v280 = vld [vmem:[%s228 + $0x38] sm:$0xff]
        %v284 = vunpack.c.l.b16 %v270
        %v285 = vunpack.c.l.b16 %v271
        %v286 = vunpack.c.l.b16 %v272
        %v287 = vpack.c.b16 %v285, %v284
        %v288 = vpack.c.b16 %v286, %v286
        %v297 = vunpack.c.l.b16 %v273
        %v298 = vunpack.c.h.b16 %v273
        %v299 = vunpack.c.l.b16 %v274
        %v300 = vunpack.c.h.b16 %v274
        %v301 = vunpack.c.l.b16 %v275
        %v302 = vunpack.c.h.b16 %v275
        %v303 = vunpack.c.l.b16 %v276
        %v304 = vunpack.c.h.b16 %v276
        %v305 = vunpack.c.l.b16 %v277
        %v306 = vunpack.c.h.b16 %v277
        %v307 = vunpack.c.l.b16 %v278
        %v308 = vunpack.c.h.b16 %v278
        %v309 = vunpack.c.l.b16 %v279
        %v310 = vunpack.c.h.b16 %v279
        %v311 = vunpack.c.l.b16 %v280
        %v312 = vunpack.c.h.b16 %v280
        %v313 = vpack.c.b16 %v299, %v297
        %v314 = vpack.c.b16 %v300, %v298
        %v315 = vpack.c.b16 %v303, %v301
        %v316 = vpack.c.b16 %v304, %v302
        %v317 = vpack.c.b16 %v307, %v305
        %v318 = vpack.c.b16 %v308, %v306
        %v319 = vpack.c.b16 %v311, %v309
        %v320 = vpack.c.b16 %v312, %v310
        %vm329 = vcmask 523264
        %v331 = vsel %vm329, %v287, 0
        %v334 = vsel %vm329, %v288, 0
        %336 = vmatpush.bf16.msra.mxu0 0
        %337 = vmatpush.bf16.msra.mxu0 0
        %338 = vmatpush.bf16.msra.mxu0 0
        %339 = vmatpush.bf16.msra.mxu0 0
        %340 = vmatpush.bf16.msra.mxu0 %v319
        %341 = vmatpush.bf16.msra.mxu0 %v317
        %342 = vmatpush.bf16.msra.mxu0 %v315
        %343 = vmatpush.bf16.msra.mxu0 %v313
        %344 = vmatmul.bf16.gmra.mxu0 %v331
        %v345 = vpop.f32.mrf.mxu0
        %v346 = vadd.f32 0.0, %v345
        %v347 = vpop.f32.mrf.mxu0
        %v348 = vadd.f32 0.0, %v347
        %349 = vmatmul.bf16.gmra.mxu0 %v334
        %v350 = vpop.f32.mrf.mxu0
        %v351 = vadd.f32 0.0, %v350
        %v352 = vpop.f32.mrf.mxu0
        %353 = vdwg.mxu0
        %354 = vmatpush.bf16.msra.mxu0 0
        %355 = vmatpush.bf16.msra.mxu0 0
        %356 = vmatpush.bf16.msra.mxu0 0
        %357 = vmatpush.bf16.msra.mxu0 0
        %358 = vmatpush.bf16.msra.mxu0 %v320
        %359 = vmatpush.bf16.msra.mxu0 %v318
        %360 = vmatpush.bf16.msra.mxu0 %v316
        %361 = vmatpush.bf16.msra.mxu0 %v314
        %362 = vmatmul.bf16.gmra.mxu0 %v331
        %v363 = vpop.f32.mrf.mxu0
        %v364 = vadd.f32 0.0, %v363
        %v365 = vpop.f32.mrf.mxu0
        %v366 = vadd.f32 0.0, %v365
        %367 = vmatmul.bf16.gmra.mxu0 %v334
        %v368 = vpop.f32.mrf.mxu0
        %v369 = vadd.f32 0.0, %v368
        %v370 = vpop.f32.mrf.mxu0
        %371 = vdwg.mxu0
        %v372 = vld [vmem:[%s2] sm:$0xff]
        %v373 = vld [vmem:[%s2 + $0x8] sm:$0xff]
        %v374 = vld [vmem:[%s2 + $0x10] sm:$0x1]
        %376 = vset.pattern.permute.xlu0 0
        %377 = vperm.xlu0 %376, %v372
        %v378 = vpop.permute.xlu0 %377
        %381 = vset.pattern.permute.xlu0 0
        %382 = vperm.xlu0 %381, %v373
        %v383 = vpop.permute.xlu0 %382
        %386 = vset.pattern.permute.xlu0 0
        %387 = vperm.xlu0 %386, %v374
        %v388 = vpop.permute.xlu0 %387
        %v390 = vadd.f32 %v346, %v378
        %v391 = vadd.f32 %v364, %v378
        %v392 = vadd.f32 %v348, %v383
        %v393 = vadd.f32 %v366, %v383
        %v394 = vadd.f32 %v351, %v388
        %v395 = vadd.f32 %v369, %v388
        %v396 = vmul.f32 %v390, 1.6765325
        %v397 = vmul.f32 %v391, 1.6765325
        %v398 = vmul.f32 %v392, 1.6765325
        %v399 = vmul.f32 %v393, 1.6765325
        %v400 = vmul.f32 %v394, 1.6765325
        %v401 = vmul.f32 %v395, 1.6765325
        %v402 = vxor.u32 %v390, 2147483648
        %v403 = vxor.u32 %v391, 2147483648
        %v404 = vxor.u32 %v392, 2147483648
        %v405 = vxor.u32 %v393, 2147483648
        %v406 = vxor.u32 %v394, 2147483648
        %v407 = vxor.u32 %v395, 2147483648
        %v408 = vmul.f32 %v402, 1.442695
        %v409 = vpow.pop %v408
        %v410 = vmul.f32 %v403, 1.442695
        %v411 = vpow.pop %v410
        %v412 = vmul.f32 %v404, 1.442695
        %v413 = vpow.pop %v412
        %v414 = vmul.f32 %v405, 1.442695
        %v415 = vpow.pop %v414
        %v416 = vmul.f32 %v406, 1.442695
        %v417 = vpow.pop %v416
        %v418 = vmul.f32 %v407, 1.442695
        %v419 = vpow.pop %v418
        %v420 = vadd.f32 %v409, 1.0
        %v421 = vadd.f32 %v411, 1.0
        %v422 = vadd.f32 %v413, 1.0
        %v423 = vadd.f32 %v415, 1.0
        %v424 = vadd.f32 %v417, 1.0
        %v425 = vadd.f32 %v419, 1.0
        %v426 = vrcp.pop %v420
        %v427 = vmul.f32 %v420, %v426
        %v428 = vsub.f32 1.0, %v427
        %v429 = vmul.f32 %v426, %v428
        %v430 = vadd.f32 %v426, %v429
        %vm431 = vweird.f32 %v420
        %vm432 = vweird.f32 %v426
        %vm433 = vmor %vm431, %vm432
        %v434 = vsel %vm433, %v426, %v430
        %v435 = vand.u32 2147483647, %v420
        %vm436 = vcmp.eq.f32.partialorder %v435, 8.507059e+37
        %v437 = vand.u32 %v420, 2147483648
        %v438 = vor.u32 1.1754944e-38, %v437
        %v439 = vsel %vm436, %v438, %v434
        %v440 = vmul.f32 1.0, %v439
        %v441 = vrcp.pop %v421
        %v442 = vmul.f32 %v421, %v441
        %v443 = vsub.f32 1.0, %v442
        %v444 = vmul.f32 %v441, %v443
        %v445 = vadd.f32 %v441, %v444
        %vm446 = vweird.f32 %v421
        %vm447 = vweird.f32 %v441
        %vm448 = vmor %vm446, %vm447
        %v449 = vsel %vm448, %v441, %v445
        %v450 = vand.u32 2147483647, %v421
        %vm451 = vcmp.eq.f32.partialorder %v450, 8.507059e+37
        %v452 = vand.u32 %v421, 2147483648
        %v453 = vor.u32 1.1754944e-38, %v452
        %v454 = vsel %vm451, %v453, %v449
        %v455 = vmul.f32 1.0, %v454
        %v456 = vrcp.pop %v422
        %v457 = vmul.f32 %v422, %v456
        %v458 = vsub.f32 1.0, %v457
        %v459 = vmul.f32 %v456, %v458
        %v460 = vadd.f32 %v456, %v459
        %vm461 = vweird.f32 %v422
        %vm462 = vweird.f32 %v456
        %vm463 = vmor %vm461, %vm462
        %v464 = vsel %vm463, %v456, %v460
        %v465 = vand.u32 2147483647, %v422
        %vm466 = vcmp.eq.f32.partialorder %v465, 8.507059e+37
        %v467 = vand.u32 %v422, 2147483648
        %v468 = vor.u32 1.1754944e-38, %v467
        %v469 = vsel %vm466, %v468, %v464
        %v470 = vmul.f32 1.0, %v469
        %v471 = vrcp.pop %v423
        %v472 = vmul.f32 %v423, %v471
        %v473 = vsub.f32 1.0, %v472
        %v474 = vmul.f32 %v471, %v473
        %v475 = vadd.f32 %v471, %v474
        %vm476 = vweird.f32 %v423
        %vm477 = vweird.f32 %v471
        %vm478 = vmor %vm476, %vm477
        %v479 = vsel %vm478, %v471, %v475
        %v480 = vand.u32 2147483647, %v423
        %vm481 = vcmp.eq.f32.partialorder %v480, 8.507059e+37
        %v482 = vand.u32 %v423, 2147483648
        %v483 = vor.u32 1.1754944e-38, %v482
        %v484 = vsel %vm481, %v483, %v479
        %v485 = vmul.f32 1.0, %v484
        %v486 = vrcp.pop %v424
        %v487 = vmul.f32 %v424, %v486
        %v488 = vsub.f32 1.0, %v487
        %v489 = vmul.f32 %v486, %v488
        %v490 = vadd.f32 %v486, %v489
        %vm491 = vweird.f32 %v424
        %vm492 = vweird.f32 %v486
        %vm493 = vmor %vm491, %vm492
        %v494 = vsel %vm493, %v486, %v490
        %v495 = vand.u32 2147483647, %v424
        %vm496 = vcmp.eq.f32.partialorder %v495, 8.507059e+37
        %v497 = vand.u32 %v424, 2147483648
        %v498 = vor.u32 1.1754944e-38, %v497
        %v499 = vsel %vm496, %v498, %v494
        %v500 = vmul.f32 1.0, %v499
        %v501 = vrcp.pop %v425
        %v502 = vmul.f32 %v425, %v501
        %v503 = vsub.f32 1.0, %v502
        %v504 = vmul.f32 %v501, %v503
        %v505 = vadd.f32 %v501, %v504
        %vm506 = vweird.f32 %v425
        %vm507 = vweird.f32 %v501
        %vm508 = vmor %vm506, %vm507
        %v509 = vsel %vm508, %v501, %v505
        %v510 = vand.u32 2147483647, %v425
        %vm511 = vcmp.eq.f32.partialorder %v510, 8.507059e+37
        %v512 = vand.u32 %v425, 2147483648
        %v513 = vor.u32 1.1754944e-38, %v512
        %v514 = vsel %vm511, %v513, %v509
        %v515 = vmul.f32 1.0, %v514
        %v516 = vmul.f32 %v396, %v440
        %v517 = vmul.f32 %v397, %v455
        %v518 = vmul.f32 %v398, %v470
        %v519 = vmul.f32 %v399, %v485
        %v520 = vmul.f32 %v400, %v500
        %v521 = vmul.f32 %v401, %v515
        %v522 = vld [vmem:[%s3] sm:$0xff]
        %v523 = vld [vmem:[%s3 + $0x8] sm:$0xff]
        %v524 = vld [vmem:[%s3 + $0x10] sm:$0x1]
        %526 = vset.pattern.permute.xlu0 0
        %527 = vperm.xlu0 %526, %v522
        %v528 = vpop.permute.xlu0 %527
        %531 = vset.pattern.permute.xlu0 0
        %532 = vperm.xlu0 %531, %v523
        %v533 = vpop.permute.xlu0 %532
        %536 = vset.pattern.permute.xlu0 0
        %537 = vperm.xlu0 %536, %v524
        %v538 = vpop.permute.xlu0 %537
        %v540 = vmul.f32 %v528, %v516
        %v541 = vmul.f32 %v528, %v517
        %v542 = vmul.f32 %v533, %v518
        %v543 = vmul.f32 %v533, %v519
        %v544 = vmul.f32 %v538, %v520
        %v545 = vmul.f32 %v538, %v521
        %v546 = vadd.f32 %v540, %v542
        %vm547 = vcmask 1040384
        %v548 = vsel %vm547, %v544, 0.0
        %v549 = vadd.f32 %v546, %v548
        %v550 = vrot.slane %v549, 4
        %v551 = vadd.f32 %v549, %v550
        %v552 = vrot.slane %v551, 2
        %v553 = vadd.f32 %v551, %v552
        %v554 = vrot.slane %v553, 1
        %v555 = vadd.f32 %v553, %v554
        %v556 = vadd.f32 %v541, %v543
        %v557 = vsel %vm547, %v545, 0.0
        %v558 = vadd.f32 %v556, %v557
        %v559 = vrot.slane %v558, 4
        %v560 = vadd.f32 %v558, %v559
        %v561 = vrot.slane %v560, 2
        %v562 = vadd.f32 %v560, %v561
        %v563 = vrot.slane %v562, 1
        %v564 = vadd.f32 %v562, %v563
        %v565 = vadd.f32 %v346, %v555
        %v566 = vadd.f32 %v364, %v564
        %v567 = vld [vmem:[%s266] ss:$2 sm:$0x3]
        %v570 = vrot.slane %v566, 7
        %v571 = vsel %vm547, %v565, %v570
        %v573 = vmul.f32 %v567, %v571
        %s574 = scalar_lea.vmem %s266, 1
        %v575 = vld [vmem:[%s574] ss:$2 sm:$0x3]
        %v576 = vadd.f32 %v573, %v575
        %v577 = vlaneseq
        %vm578 = vcmp.ge.s32.totalorder %v577, 0
        %vm579 = vcmp.lt.s32.totalorder %v577, 256
        %vm580 = vmand %vm578, %vm579
        %581 = vst.msk [vmem:[%s260] sm:$0x3] %vm580, %v576
        %s582 = sand.u32 %s145, 1
        %s583 = scalar_lea.sflag [#allocation4], %s582
        %s584 = sand.u32 %s145, 1
        %s585 = smul.addr %s584, 2
        %s586 = scalar_lea.vmem [#allocation5], %s585
        // Predicated region
        $region45: #{forward_atomistic_network.1} parent=39 // pred_check
          %p587 = pneg %p155
        $region46: #{forward_atomistic_network.1} parent=39 // pred_check_branch
          %589 = sbr.rel (%p587) target = $region48
        $region47: #{forward_atomistic_network.1} parent=39 // pred_region
          %s590 = smul.u32 2, %s22
          %592 = vsyncadd %s583, 0
          %s593 = scalar_lea.hbm %s5, %s590
          %s595 = sshll.u32 %s586, 4
          %s596 = int_to_ptr.vmem [resolvable:$true] %s595
          %s597 = sshll.u32 %s593, 4
          %s598 = int_to_ptr.hbm [resolvable:$true] %s597
          %600 = dma.vmem_to_hbm [thread:$0]  %s596, 32, %s598, %s583
        $region48: #{forward_atomistic_network.1} parent=39 // pred_fallthru
          _
      $region40: #{forward_atomistic_network.1} parent=5 // pred_fallthru
        _
      %p601 = scmp.le.s32.totalorder 2, %s17
      // Predicated region
      $region49: #{forward_atomistic_network.1} parent=5 // pred_check
        %p602 = pneg %p601
      $region50: #{forward_atomistic_network.1} parent=5 // pred_check_branch
        %604 = sbr.rel (%p602) target = $region52
      $region51: #{forward_atomistic_network.1} parent=5 // pred_region
        %s605 = ssub.s32 %s17, 2
        // Predicated region
        $region53: #{forward_atomistic_network.1} parent=51 // pred_check
          %p606 = pneg %p161
        $region54: #{forward_atomistic_network.1} parent=51 // pred_check_branch
          %608 = sbr.rel (%p606) target = $region56
        $region55: #{forward_atomistic_network.1} parent=51 // pred_region
          %s609 = sand.u32 %s146, 1
          %s610 = scalar_lea.sflag [#allocation4], %s609
          %s611 = sand.u32 %s146, 1
          %s612 = smul.addr %s611, 2
          %s613 = scalar_lea.vmem [#allocation5], %s612
          %615 = dma.done %s610, 32
        $region56: #{forward_atomistic_network.1} parent=51 // pred_fallthru
          _
      $region52: #{forward_atomistic_network.1} parent=5 // pred_fallthru
        _
    $region6: #{forward_atomistic_network.1} parent=1 // loop_footer
      %s21 = sadd.s32 1, %s17
    $region7: #{forward_atomistic_network.1} parent=1 // loop_footer_branch
      %16 = sbr.rel target = $region3
    $region8: #{forward_atomistic_network.1} parent=1 // loop_exit
      _
    %616 = vsyncpa [#allocation3], 1
    %s617 = scalar_lea.sflag [#allocation3], 1
    %618 = vsyncpa %s617, 1
    %619 = vsyncpa [#allocation4], 1
    %s620 = scalar_lea.sflag [#allocation4], 1
    %621 = vsyncpa %s620, 1

</llo_original>
